<compile_context>
chip_gen: v7x
topology: tpu7x:2x2x1
jax: 0.10.0
libtpu: 0.0.40
codegen_flags: <defaults>
</compile_context>

<pallas_src>
import functools

import jax
import jax.numpy as jnp
from jax import lax
from jax.experimental import pallas as pl
from jax.experimental.pallas import tpu as pltpu


def _round_up(x, m):
    return (x + m - 1) // m * m


def _vmem_limit(nbytes):
    # 1.5x headroom, clamped to a range that is safe on v5e/v6e/v7x.
    return int(min(max(int(nbytes * 1.5), 4 << 20), 40 << 20))


# ---------------- pass 1: conv tile + per-tile BN partial stats ----------------
def _conv_stats_kernel(x_ref, w_ref, y_ref, sum_ref, ssq_ref):
    # (tm, K) @ (K, Cout_pad) on the MXU with an f32 accumulator.
    y = jnp.dot(x_ref[...], w_ref[...], preferred_element_type=jnp.float32)
    y_ref[...] = y
    # BatchNorm partials computed while y is live in vregs (one-pass stats).
    s = jnp.sum(y, axis=0, keepdims=True)          # (1, Cout_pad)
    sq = jnp.sum(y * y, axis=0, keepdims=True)     # (1, Cout_pad)
    sum_ref[...] = s[None]
    ssq_ref[...] = sq[None]


# ---------------- pass 2: normalize + affine + ReLU ----------------
def _bn_relu_kernel(y_ref, scale_ref, bias_ref, o_ref, *, relu6):
    y = y_ref[...] * scale_ref[...] + bias_ref[...]
    y = jnp.maximum(y, 0.0)
    if relu6:
        y = jnp.minimum(y, 6.0)
    o_ref[...] = y.astype(o_ref.dtype)


def conv_bn_relu(x_nchw, w_oihw, gamma, beta, *, stride=1, padding=0,
                 dilation=1, groups=1, eps=1e-5, relu6=False,
                 tile_m=256, operand_dtype=None):
    """Pallas implementation of _ConvBNReLU.forward (NCHW in, NCHW out)."""
    assert stride == 1 and groups == 1, "only stride=1, groups=1 supported"
    N, Cin, H, W = x_nchw.shape
    Cout, Cin_w, KH, KW = w_oihw.shape
    assert Cin_w == Cin
    Ho = (H + 2 * padding - dilation * (KH - 1) - 1) // stride + 1
    Wo = (W + 2 * padding - dilation * (KW - 1) - 1) // stride + 1
    M = N * Ho * Wo
    K_total = KH * KW * Cin
    Cout_pad = _round_up(Cout, 128)          # lane-dense output / weight columns

    # Matmul operand dtype (set to jnp.bfloat16 for ~3x MXU throughput when the
    # accuracy budget allows; accumulation stays f32 either way).
    op_dtype = x_nchw.dtype if operand_dtype is None else operand_dtype
    op_itemsize = jnp.dtype(op_dtype).itemsize
    out_itemsize = jnp.dtype(x_nchw.dtype).itemsize

    # ---- layout glue (plain JAX): NCHW->NHWC, pad, taps folded into the K dim ----
    # TODO(synk): keep the surrounding model NHWC to drop these two transposes.
    x = jnp.transpose(x_nchw, (0, 2, 3, 1))                          # NHWC
    x = jnp.pad(x, ((0, 0), (padding, padding), (padding, padding), (0, 0)))
    cols = [x[:, kh * dilation:kh * dilation + Ho,
              kw * dilation:kw * dilation + Wo, :]
            for kh in range(KH) for kw in range(KW)]
    x_cols = jnp.concatenate(cols, axis=-1).reshape(M, K_total).astype(op_dtype)

    # (Cout, Cin, KH, KW) -> (KH*KW*Cin, Cout_pad), index order kh, kw, ci.
    w_mat = jnp.transpose(w_oihw, (2, 3, 1, 0)).reshape(K_total, Cout)
    w_mat = jnp.pad(w_mat, ((0, 0), (0, Cout_pad - Cout))).astype(op_dtype)

    # ---- M tiling ----
    tm = min(tile_m, _round_up(M, 8))
    tm = _round_up(tm, 8)
    M_pad = _round_up(M, tm)
    num_tiles = M_pad // tm
    if M_pad != M:
        # Zero rows contribute exactly 0 to the conv output and to the BN
        # partial sums; stats are divided by the true count M below.
        x_cols = jnp.pad(x_cols, ((0, M_pad - M), (0, 0)))

    # ---- pass 1: conv + per-tile stats (gridded, pipelined) ----
    p1_bytes = (2 * tm * K_total * op_itemsize          # x tile (double-buffered)
                + 2 * K_total * Cout_pad * op_itemsize  # resident weights
                + 4 * tm * Cout_pad * 4                 # y tile + temporaries
                + 8 * Cout_pad * 4)                     # stats tiles
    conv_y, tile_sum, tile_ssq = pl.pallas_call(
        _conv_stats_kernel,
        grid=(num_tiles,),
        in_specs=[
            pl.BlockSpec((tm, K_total), lambda i: (i, 0)),
            pl.BlockSpec((K_total, Cout_pad), lambda i: (0, 0)),   # resident
        ],
        out_specs=(
            pl.BlockSpec((tm, Cout_pad), lambda i: (i, 0)),
            pl.BlockSpec((1, 1, Cout_pad), lambda i: (i, 0, 0)),
            pl.BlockSpec((1, 1, Cout_pad), lambda i: (i, 0, 0)),
        ),
        out_shape=(
            jax.ShapeDtypeStruct((M_pad, Cout_pad), jnp.float32),
            jax.ShapeDtypeStruct((num_tiles, 1, Cout_pad), jnp.float32),
            jax.ShapeDtypeStruct((num_tiles, 1, Cout_pad), jnp.float32),
        ),
        compiler_params=pltpu.CompilerParams(
            dimension_semantics=("parallel",),
            vmem_limit_bytes=_vmem_limit(p1_bytes)),
    )(x_cols, w_mat)

    # ---- tiny global stats combine (training-mode BN: biased batch variance) ----
    count = float(M)
    mean = jnp.sum(tile_sum, axis=0) / count                    # (1, Cout_pad)
    var = jnp.sum(tile_ssq, axis=0) / count - mean * mean
    var = jnp.maximum(var, 0.0)   # guard E[x^2]-mu^2 cancellation
    inv_std = lax.rsqrt(var + eps)
    gamma_pad = jnp.pad(gamma.astype(jnp.float32).reshape(1, Cout),
                        ((0, 0), (0, Cout_pad - Cout)))
    beta_pad = jnp.pad(beta.astype(jnp.float32).reshape(1, Cout),
                       ((0, 0), (0, Cout_pad - Cout)))
    scale = gamma_pad * inv_std
    bias = beta_pad - mean * scale

    # ---- pass 2: normalize + ReLU, lane-dense stores ----
    p2_bytes = (2 * tm * Cout_pad * 4                   # conv tile in
                + 2 * tm * Cout_pad * out_itemsize      # output tile
                + 4 * Cout_pad * 4)                     # scale/bias resident
    out_flat = pl.pallas_call(
        functools.partial(_bn_relu_kernel, relu6=relu6),
        grid=(num_tiles,),
        in_specs=[
            pl.BlockSpec((tm, Cout_pad), lambda i: (i, 0)),
            pl.BlockSpec((1, Cout_pad), lambda i: (0, 0)),         # resident
            pl.BlockSpec((1, Cout_pad), lambda i: (0, 0)),         # resident
        ],
        out_specs=pl.BlockSpec((tm, Cout_pad), lambda i: (i, 0)),
        out_shape=jax.ShapeDtypeStruct((M_pad, Cout_pad), x_nchw.dtype),
        compiler_params=pltpu.CompilerParams(
            dimension_semantics=("parallel",),
            vmem_limit_bytes=_vmem_limit(p2_bytes)),
    )(conv_y, scale, bias)

    out = out_flat[:M, :Cout].reshape(N, Ho, Wo, Cout)
    return jnp.transpose(out, (0, 3, 1, 2))                        # back to NCHW


def reference(x_nchw, w_oihw, gamma, beta, *, stride=1, padding=0,
              dilation=1, eps=1e-5, relu6=False):
    """Pure-JAX reference matching PyTorch Conv2d + BatchNorm2d(train) + ReLU."""
    y = lax.conv_general_dilated(
        x_nchw, w_oihw, window_strides=(stride, stride),
        padding=[(padding, padding), (padding, padding)],
        rhs_dilation=(dilation, dilation),
        dimension_numbers=("NCHW", "OIHW", "NCHW"))
    mean = jnp.mean(y, axis=(0, 2, 3), keepdims=True)
    var = jnp.mean((y - mean) ** 2, axis=(0, 2, 3), keepdims=True)
    y = (y - mean) * lax.rsqrt(var + eps) * gamma.reshape(1, -1, 1, 1) \
        + beta.reshape(1, -1, 1, 1)
    y = jnp.maximum(y, 0.0)
    if relu6:
        y = jnp.minimum(y, 6.0)
    return y


if __name__ == "__main__":
    key = jax.random.PRNGKey(0)
    k1, k2, k3, k4 = jax.random.split(key, 4)

    # Small shapes consistent with the module: 3x3 conv, stride 1, padding 1.
    N, Cin, H, W = 2, 4, 16, 16
    Cout, K = 8, 3

    x = jax.random.normal(k1, (N, Cin, H, W), jnp.float32)
    fan_in = Cin * K * K
    w = jax.random.normal(k2, (Cout, Cin, K, K), jnp.float32) * (2.0 / fan_in) ** 0.5
    gamma = 1.0 + 0.1 * jax.random.normal(k3, (Cout,), jnp.float32)
    beta = 0.1 * jax.random.normal(k4, (Cout,), jnp.float32)

    # tile_m=256 -> grid of 2 tiles at this size, exercising the multi-tile
    # pipeline and the cross-tile BatchNorm stats combine.
    out = conv_bn_relu(x, w, gamma, beta, stride=1, padding=1, dilation=1,
                       groups=1, relu6=False, tile_m=256)
    out = jax.block_until_ready(out)

    ref = reference(x, w, gamma, beta, stride=1, padding=1, dilation=1, relu6=False)
    assert out.shape == (N, Cout, H, W), out.shape
    assert jnp.allclose(out, ref, atol=1e-4, rtol=1e-4), \
        float(jnp.max(jnp.abs(out - ref)))
    print("KERNEL_OK")
</pallas_src>

<mosaic_0001>
module attributes {stable_mosaic.version = 11 : i64} {
  func.func @_conv_stats_kernel(%arg0: i32, %arg1: memref<256x36xf32, #tpu.memory_space<vmem>>, %arg2: memref<36x128xf32, #tpu.memory_space<vmem>>, %arg3: memref<256x128xf32, #tpu.memory_space<vmem>>, %arg4: memref<1x1x128xf32, #tpu.memory_space<vmem>>, %arg5: memref<1x1x128xf32, #tpu.memory_space<vmem>>) attributes {dimension_semantics = [#tpu.dimension_semantics<parallel>], iteration_bounds = array<i64: 2>, scalar_prefetch = 0 : i64, scratch_operands = 0 : i64, tpu.core_type = #tpu.core_type<tc>, window_params = [{transform_indices = @transform_0, window_bounds = array<i64: 256, 36>}, {pipeline_mode = #tpu.pipeline_mode<synchronous>, transform_indices = @transform_1, window_bounds = array<i64: 36, 128>}, {transform_indices = @transform_2, window_bounds = array<i64: 256, 128>}, {transform_indices = @transform_3, window_bounds = array<i64: 1, 1, 128>}, {transform_indices = @transform_4, window_bounds = array<i64: 1, 1, 128>}]} {
    %c0 = arith.constant 0 : index
    %c0_0 = arith.constant 0 : index
    %0 = vector.load %arg1[%c0, %c0_0] : memref<256x36xf32, #tpu.memory_space<vmem>>, vector<256x36xf32>
    %c0_1 = arith.constant 0 : index
    %c0_2 = arith.constant 0 : index
    %1 = vector.load %arg2[%c0_1, %c0_2] : memref<36x128xf32, #tpu.memory_space<vmem>>, vector<36x128xf32>
    %cst = arith.constant dense<0.000000e+00> : vector<256x128xf32>
    %2 = tpu.matmul %0, %1, %cst {dimension_numbers = #tpu.dot_dimension_numbers<[1], [0], [0], [1], [0, 0, 1, 1], [], []>} : vector<256x36xf32>, vector<36x128xf32>, vector<256x128xf32> -> vector<256x128xf32>
    %c0_3 = arith.constant 0 : index
    %c0_4 = arith.constant 0 : index
    %3 = vector.load %arg3[%c0_3, %c0_4] : memref<256x128xf32, #tpu.memory_space<vmem>>, vector<256x128xf32>
    tpu.vector_store %arg3[%c0_3, %c0_4], %2 {strides = array<i32>} : memref<256x128xf32, #tpu.memory_space<vmem>>, vector<256x128xf32>,
    %cst_5 = arith.constant dense<0.000000e+00> : vector<128xf32>
    %4 = vector.multi_reduction <add>, %2, %cst_5 [0] : vector<256x128xf32> to vector<128xf32>
    %5 = vector.shape_cast %4 : vector<128xf32> to vector<1x128xf32>
    %6 = arith.mulf %2, %2 : vector<256x128xf32>
    %cst_6 = arith.constant dense<0.000000e+00> : vector<128xf32>
    %7 = vector.multi_reduction <add>, %6, %cst_6 [0] : vector<256x128xf32> to vector<128xf32>
    %8 = vector.shape_cast %7 : vector<128xf32> to vector<1x128xf32>
    %9 = vector.shape_cast %5 : vector<1x128xf32> to vector<1x1x128xf32>
    %c0_7 = arith.constant 0 : index
    %c0_8 = arith.constant 0 : index
    %c0_9 = arith.constant 0 : index
    %10 = vector.load %arg4[%c0_7, %c0_8, %c0_9] : memref<1x1x128xf32, #tpu.memory_space<vmem>>, vector<1x1x128xf32>
    tpu.vector_store %arg4[%c0_7, %c0_8, %c0_9], %9 {strides = array<i32>} : memref<1x1x128xf32, #tpu.memory_space<vmem>>, vector<1x1x128xf32>,
    %11 = vector.shape_cast %8 : vector<1x128xf32> to vector<1x1x128xf32>
    %c0_10 = arith.constant 0 : index
    %c0_11 = arith.constant 0 : index
    %c0_12 = arith.constant 0 : index
    %12 = vector.load %arg5[%c0_10, %c0_11, %c0_12] : memref<1x1x128xf32, #tpu.memory_space<vmem>>, vector<1x1x128xf32>
    tpu.vector_store %arg5[%c0_10, %c0_11, %c0_12], %11 {strides = array<i32>} : memref<1x1x128xf32, #tpu.memory_space<vmem>>, vector<1x1x128xf32>,
    return
  }
  func.func @transform_0(%arg0: i32) -> (i32, i32) {
    %c0_i32 = arith.constant 0 : i32
    %c0_i32_0 = arith.constant 0 : i32
    return %arg0, %c0_i32 : i32, i32
  }
  func.func @transform_1(%arg0: i32) -> (i32, i32) {
    %c0_i32 = arith.constant 0 : i32
    %c0_i32_0 = arith.constant 0 : i32
    %c0_i32_1 = arith.constant 0 : i32
    return %c0_i32, %c0_i32_0 : i32, i32
  }
  func.func @transform_2(%arg0: i32) -> (i32, i32) {
    %c0_i32 = arith.constant 0 : i32
    %c0_i32_0 = arith.constant 0 : i32
    return %arg0, %c0_i32 : i32, i32
  }
  func.func @transform_3(%arg0: i32) -> (i32, i32, i32) {
    %c0_i32 = arith.constant 0 : i32
    %c0_i32_0 = arith.constant 0 : i32
    %c0_i32_1 = arith.constant 0 : i32
    return %arg0, %c0_i32, %c0_i32_0 : i32, i32, i32
  }
  func.func @transform_4(%arg0: i32) -> (i32, i32, i32) {
    %c0_i32 = arith.constant 0 : i32
    %c0_i32_0 = arith.constant 0 : i32
    %c0_i32_1 = arith.constant 0 : i32
    return %arg0, %c0_i32, %c0_i32_0 : i32, i32, i32
  }
}

</mosaic_0001>

<llo_original>
// kernel: tpu_custom_call.1
$region0: #{tpu_custom_call.1}
  #allocation0 [shape = 'u32[]', space=smem, size = 0x4, offset = 0x4, fixed_abs, tag = 'smem constant byte address 0x4 - core index']
  #allocation1 [shape = 'u32[144,128]{1,0:T(1,128)}', space=vmem, size = 0x12000, scoped, tag = 'internal scratch']
  %s0 = inlined_call_operand.vmem [shape: f32[512,36], index: 0, kind: input, shape index: {}]
  %s1 = inlined_call_operand.vmem [shape: f32[36,128], index: 1, kind: input, shape index: {}]
  %s2 = inlined_call_operand.hbm [shape: f32[512,128], index: 2, kind: output, shape index: {0}]
  %s3 = inlined_call_operand.hbm [shape: f32[2,1,128], index: 3, kind: output, shape index: {1}]
  %s4 = inlined_call_operand.hbm [shape: f32[2,1,128], index: 4, kind: output, shape index: {2}]
  %5 = xla_tuple %s2, %s3, %s4
  %s6 = sld [smem:[#allocation0]]
  $region57: #{tpu_custom_call.1} parent=0
    _
  %s8 = ssub.s32 1, %s6
  %s9 = scalar_select 0, %s8, %s6
  $region1: #{tpu_custom_call.1} parent=0
    #allocation2 [shape = 'u8[262144]{0}', space=vmem, size = 0x40000, scoped, tag = 'output window, operand 0']
    #allocation3 [shape = 's32[2]{0}', space=sflag, size = 0x8, scoped, tag = 'scoped memory for tpu_custom_call.1']
    #allocation4 [shape = 'u8[1024]{0}', space=vmem, size = 0x400, scoped, tag = 'output window, operand 1']
    #allocation5 [shape = 's32[2]{0}', space=sflag, size = 0x8, scoped, tag = 'scoped memory for tpu_custom_call.1']
    #allocation6 [shape = 'u8[1024]{0}', space=vmem, size = 0x400, scoped, tag = 'output window, operand 2']
    %10 = vsyncpa [#allocation3], 0
    %s11 = scalar_lea.sflag [#allocation3], 1
    %12 = vsyncpa %s11, 0
    %13 = vsyncpa [#allocation5], 0
    %s14 = scalar_lea.sflag [#allocation5], 1
    %15 = vsyncpa %s14, 0
    loop: start=0, step=1, limit=4
    $region2: #{tpu_custom_call.1} parent=1 // loop_pre_header
      _
    $region3: #{tpu_custom_call.1} parent=1 // loop_header
      %s17 = sphi 0, %s21
      %p18 = scmp.ge.s32.totalorder %s17, 4
      %s27 = sphi 0, %s29
      %s30 = sphi 0, %s27
      %s31 = sphi 0, %s30
      %s47 = sphi 0, %s31
      %s51 = sphi 0, %s51
      %s53 = sphi 0, %s51
      %s54 = sphi 0, %s53
      %s68 = sphi 0, %s54
      %s74 = sphi 0, %s76
      %s77 = sphi 0, %s74
      %s78 = sphi 0, %s77
      %s94 = sphi 0, %s78
      %s100 = sphi 0, %s102
      %s103 = sphi 0, %s100
      %s104 = sphi 0, %s103
      %s120 = sphi 0, %s104
      %s126 = sphi 0, %s128
      %s129 = sphi 0, %s126
      %s130 = sphi 0, %s129
      %s146 = sphi 0, %s130
    $region4: #{tpu_custom_call.1} parent=1 // loop_header_branch
      %20 = sbr.rel (%p18) target = $region8
    $region5: #{tpu_custom_call.1} parent=1 // loop_body
      %s22 = ssub.s32 %s17, 1
      %s23 = ssub.s32 %s17, 2
      %s24 = sadd.s32 %s17, 1
      %s25 = ssub.s32 %s17, %s24
      %p26 = scmp.eq.s32.totalorder %s25, 0
      %s28 = sadd.s32 %s27, 1
      %s29 = scalar_select %p26, %s27, %s28
      %p32 = pneg %p26
      %p33 = scmp.eq.s32.totalorder %s17, 1
      %p34 = por %p32, %p33
      %p35 = scmp.ne.s32.totalorder %s27, %s30
      %p36 = scmp.eq.s32.totalorder %s17, 0
      %p37 = por %p35, %p36
      %p38 = scmp.ne.s32.totalorder %s27, %s30
      %p39 = scmp.eq.s32.totalorder %s22, 1
      %p40 = por %p38, %p39
      %p41 = scmp.ne.s32.totalorder %s30, %s31
      %p42 = scmp.eq.s32.totalorder %s22, 0
      %p43 = por %p41, %p42
      %p44 = scmp.ne.s32.totalorder %s30, %s31
      %p45 = scmp.eq.s32.totalorder %s23, 1
      %p46 = por %p44, %p45
      %p48 = scmp.ne.s32.totalorder %s31, %s47
      %p49 = scmp.eq.s32.totalorder %s23, 0
      %p50 = por %p48, %p49
      %s52 = sadd.s32 %s51, 1
      %p55 = scmp.eq.s32.totalorder %s17, 1
      %p56 = scmp.ne.s32.totalorder %s51, %s53
      %p57 = scmp.eq.s32.totalorder %s17, 0
      %p58 = por %p56, %p57
      %p59 = scmp.ne.s32.totalorder %s51, %s53
      %p60 = scmp.eq.s32.totalorder %s22, 1
      %p61 = por %p59, %p60
      %p62 = scmp.ne.s32.totalorder %s53, %s54
      %p63 = scmp.eq.s32.totalorder %s22, 0
      %p64 = por %p62, %p63
      %p65 = scmp.ne.s32.totalorder %s53, %s54
      %p66 = scmp.eq.s32.totalorder %s23, 1
      %p67 = por %p65, %p66
      %p69 = scmp.ne.s32.totalorder %s54, %s68
      %p70 = scmp.eq.s32.totalorder %s23, 0
      %p71 = por %p69, %p70
      %s72 = ssub.s32 %s17, %s24
      %p73 = scmp.eq.s32.totalorder %s72, 0
      %s75 = sadd.s32 %s74, 1
      %s76 = scalar_select %p73, %s74, %s75
      %p79 = pneg %p73
      %p80 = scmp.eq.s32.totalorder %s17, 1
      %p81 = por %p79, %p80
      %p82 = scmp.ne.s32.totalorder %s74, %s77
      %p83 = scmp.eq.s32.totalorder %s17, 0
      %p84 = por %p82, %p83
      %p85 = scmp.ne.s32.totalorder %s74, %s77
      %p86 = scmp.eq.s32.totalorder %s22, 1
      %p87 = por %p85, %p86
      %p88 = scmp.ne.s32.totalorder %s77, %s78
      %p89 = scmp.eq.s32.totalorder %s22, 0
      %p90 = por %p88, %p89
      %p91 = scmp.ne.s32.totalorder %s77, %s78
      %p92 = scmp.eq.s32.totalorder %s23, 1
      %p93 = por %p91, %p92
      %p95 = scmp.ne.s32.totalorder %s78, %s94
      %p96 = scmp.eq.s32.totalorder %s23, 0
      %p97 = por %p95, %p96
      %s98 = ssub.s32 %s17, %s24
      %p99 = scmp.eq.s32.totalorder %s98, 0
      %s101 = sadd.s32 %s100, 1
      %s102 = scalar_select %p99, %s100, %s101
      %p105 = pneg %p99
      %p106 = scmp.eq.s32.totalorder %s17, 1
      %p107 = por %p105, %p106
      %p108 = scmp.ne.s32.totalorder %s100, %s103
      %p109 = scmp.eq.s32.totalorder %s17, 0
      %p110 = por %p108, %p109
      %p111 = scmp.ne.s32.totalorder %s100, %s103
      %p112 = scmp.eq.s32.totalorder %s22, 1
      %p113 = por %p111, %p112
      %p114 = scmp.ne.s32.totalorder %s103, %s104
      %p115 = scmp.eq.s32.totalorder %s22, 0
      %p116 = por %p114, %p115
      %p117 = scmp.ne.s32.totalorder %s103, %s104
      %p118 = scmp.eq.s32.totalorder %s23, 1
      %p119 = por %p117, %p118
      %p121 = scmp.ne.s32.totalorder %s104, %s120
      %p122 = scmp.eq.s32.totalorder %s23, 0
      %p123 = por %p121, %p122
      %s124 = ssub.s32 %s17, %s24
      %p125 = scmp.eq.s32.totalorder %s124, 0
      %s127 = sadd.s32 %s126, 1
      %s128 = scalar_select %p125, %s126, %s127
      %p131 = pneg %p125
      %p132 = scmp.eq.s32.totalorder %s17, 1
      %p133 = por %p131, %p132
      %p134 = scmp.ne.s32.totalorder %s126, %s129
      %p135 = scmp.eq.s32.totalorder %s17, 0
      %p136 = por %p134, %p135
      %p137 = scmp.ne.s32.totalorder %s126, %s129
      %p138 = scmp.eq.s32.totalorder %s22, 1
      %p139 = por %p137, %p138
      %p140 = scmp.ne.s32.totalorder %s129, %s130
      %p141 = scmp.eq.s32.totalorder %s22, 0
      %p142 = por %p140, %p141
      %p143 = scmp.ne.s32.totalorder %s129, %s130
      %p144 = scmp.eq.s32.totalorder %s23, 1
      %p145 = por %p143, %p144
      %p147 = scmp.ne.s32.totalorder %s130, %s146
      %p148 = scmp.eq.s32.totalorder %s23, 0
      %p149 = por %p147, %p148
      %p150 = scmp.le.s32.totalorder 1, %s17
      %p151 = scmp.lt.s32.totalorder %s17, 3
      %p152 = pnand %p150, %p151
      %p153 = pneg %p152
      // Predicated region
      $region9: #{tpu_custom_call.1} parent=5 // pred_check
        _
      $region10: #{tpu_custom_call.1} parent=5 // pred_check_branch
        %155 = sbr.rel (%p152) target = $region12
      $region11: #{tpu_custom_call.1} parent=5 // pred_region
        %s156 = ssub.s32 %s17, 1
        // Predicated region
        $region13: #{tpu_custom_call.1} parent=11 // pred_check
          %p157 = pneg %p64
        $region14: #{tpu_custom_call.1} parent=11 // pred_check_branch
          %159 = sbr.rel (%p157) target = $region16
        $region15: #{tpu_custom_call.1} parent=11 // pred_region
          _
        $region16: #{tpu_custom_call.1} parent=11 // pred_fallthru
          _
      $region12: #{tpu_custom_call.1} parent=5 // pred_fallthru
        _
      %p160 = scmp.lt.s32.totalorder %s17, 2
      // Predicated region
      $region17: #{tpu_custom_call.1} parent=5 // pred_check
        %p161 = pneg %p160
      $region18: #{tpu_custom_call.1} parent=5 // pred_check_branch
        %163 = sbr.rel (%p161) target = $region20
      $region19: #{tpu_custom_call.1} parent=5 // pred_region
        // Predicated region
        $region21: #{tpu_custom_call.1} parent=19 // pred_check
          %p164 = pneg %p37
        $region22: #{tpu_custom_call.1} parent=19 // pred_check_branch
          %166 = sbr.rel (%p164) target = $region24
        $region23: #{tpu_custom_call.1} parent=19 // pred_region
          %s167 = smul.u32 32, %s17
          %p168 = scmp.lt.s32.totalorder %s167, 63
          %s169 = scalar_select %p168, %s167, 63
          %s170 = smul.addr %s169, 8
          %s171 = scalar_lea.vmem %s0, %s170
          %s172 = smul.u32 32, %s17
        $region24: #{tpu_custom_call.1} parent=19 // pred_fallthru
          _
      $region20: #{tpu_custom_call.1} parent=5 // pred_fallthru
        _
      %p173 = scmp.le.s32.totalorder 1, %s17
      %p174 = scmp.lt.s32.totalorder %s17, 3
      %p175 = pnand %p173, %p174
      %p176 = pneg %p175
      // Predicated region
      $region25: #{tpu_custom_call.1} parent=5 // pred_check
        _
      $region26: #{tpu_custom_call.1} parent=5 // pred_check_branch
        %178 = sbr.rel (%p175) target = $region28
      $region27: #{tpu_custom_call.1} parent=5 // pred_region
        %s179 = ssub.s32 %s17, 1
        %s180 = smul.u32 32, %s22
        %p181 = scmp.lt.s32.totalorder %s180, 63
        %s182 = scalar_select %p181, %s180, 63
        %s183 = smul.addr %s182, 8
        %s184 = scalar_lea.vmem %s0, %s183
        %p185 = pneg %p43
        %p186 = pneg %p40
        %p187 = pneg %p64
        %p188 = pneg %p61
        %p189 = pneg %p90
        %p190 = pneg %p87
        %s191 = sand.u32 %s77, 1
        %s192 = scalar_lea.sflag [#allocation3], %s191
        %s193 = sand.u32 %s77, 1
        %s194 = smul.addr %s193, 256
        %s195 = scalar_lea.vmem [#allocation2], %s194
        %p196 = pneg %p116
        %p197 = pneg %p113
        %s198 = sand.u32 %s22, 1
        %s199 = scalar_lea.sflag [#allocation5], %s198
        %s200 = sand.u32 %s103, 1
        %s201 = scalar_lea.vmem [#allocation4], %s200
        %p202 = pneg %p142
        %p203 = pneg %p139
        %s204 = sand.u32 %s22, 1
        %s205 = scalar_lea.sflag [#allocation5], %s204
        %s206 = sand.u32 %s129, 1
        %s207 = scalar_lea.vmem [#allocation6], %s206
        %s208 = smul.u32 32, %s22
        %p209 = scmp.lt.s32.totalorder %s208, 63
        %s210 = scalar_select %p209, %s208, 63
        %s211 = smul.addr %s210, 8
        %s212 = scalar_lea.vmem %s0, %s211
        %s213 = smul.u32 32, %s22
        %s214 = smul.u32 32, %s22
        %v215 = vld [vmem:[%s212] sm:$0xff]
        %v216 = vld [vmem:[%s212 + $0x8] sm:$0xff]
        %v217 = vld [vmem:[%s212 + $0x10] sm:$0xff]
        %v218 = vld [vmem:[%s212 + $0x18] sm:$0xff]
        %v219 = vld [vmem:[%s212 + $0x20] sm:$0xff]
        %v220 = vld [vmem:[%s212 + $0x28] sm:$0xff]
        %v221 = vld [vmem:[%s212 + $0x30] sm:$0xff]
        %v222 = vld [vmem:[%s212 + $0x38] sm:$0xff]
        %v223 = vld [vmem:[%s212 + $0x40] sm:$0xff]
        %v224 = vld [vmem:[%s212 + $0x48] sm:$0xff]
        %v225 = vld [vmem:[%s212 + $0x50] sm:$0xff]
        %v226 = vld [vmem:[%s212 + $0x58] sm:$0xff]
        %v227 = vld [vmem:[%s212 + $0x60] sm:$0xff]
        %v228 = vld [vmem:[%s212 + $0x68] sm:$0xff]
        %v229 = vld [vmem:[%s212 + $0x70] sm:$0xff]
        %v230 = vld [vmem:[%s212 + $0x78] sm:$0xff]
        %v231 = vld [vmem:[%s212 + $0x80] sm:$0xff]
        %v232 = vld [vmem:[%s212 + $0x88] sm:$0xff]
        %v233 = vld [vmem:[%s212 + $0x90] sm:$0xff]
        %v234 = vld [vmem:[%s212 + $0x98] sm:$0xff]
        %v235 = vld [vmem:[%s212 + $0xa0] sm:$0xff]
        %v236 = vld [vmem:[%s212 + $0xa8] sm:$0xff]
        %v237 = vld [vmem:[%s212 + $0xb0] sm:$0xff]
        %v238 = vld [vmem:[%s212 + $0xb8] sm:$0xff]
        %v239 = vld [vmem:[%s212 + $0xc0] sm:$0xff]
        %v240 = vld [vmem:[%s212 + $0xc8] sm:$0xff]
        %v241 = vld [vmem:[%s212 + $0xd0] sm:$0xff]
        %v242 = vld [vmem:[%s212 + $0xd8] sm:$0xff]
        %v243 = vld [vmem:[%s212 + $0xe0] sm:$0xff]
        %v244 = vld [vmem:[%s212 + $0xe8] sm:$0xff]
        %v245 = vld [vmem:[%s212 + $0xf0] sm:$0xff]
        %v246 = vld [vmem:[%s212 + $0xf8] sm:$0xff]
        %v247 = vld [vmem:[%s1] sm:$0xff]
        %v248 = vld [vmem:[%s1 + $0x8] sm:$0xff]
        %v249 = vld [vmem:[%s1 + $0x10] sm:$0xff]
        %v250 = vld [vmem:[%s1 + $0x18] sm:$0xff]
        %v251 = vld [vmem:[%s1 + $0x20] sm:$0xf]
        %vm252 = vcmask 293888
        %v254 = vsel %vm252, %v215, 0
        %v257 = vsel %vm252, %v216, 0
        %v260 = vsel %vm252, %v217, 0
        %v263 = vsel %vm252, %v218, 0
        %v266 = vsel %vm252, %v219, 0
        %v269 = vsel %vm252, %v220, 0
        %v272 = vsel %vm252, %v221, 0
        %v275 = vsel %vm252, %v222, 0
        %v278 = vsel %vm252, %v223, 0
        %v281 = vsel %vm252, %v224, 0
        %v284 = vsel %vm252, %v225, 0
        %v287 = vsel %vm252, %v226, 0
        %v290 = vsel %vm252, %v227, 0
        %v293 = vsel %vm252, %v228, 0
        %v296 = vsel %vm252, %v229, 0
        %v299 = vsel %vm252, %v230, 0
        %v302 = vsel %vm252, %v231, 0
        %v305 = vsel %vm252, %v232, 0
        %v308 = vsel %vm252, %v233, 0
        %v311 = vsel %vm252, %v234, 0
        %v314 = vsel %vm252, %v235, 0
        %v317 = vsel %vm252, %v236, 0
        %v320 = vsel %vm252, %v237, 0
        %v323 = vsel %vm252, %v238, 0
        %v326 = vsel %vm252, %v239, 0
        %v329 = vsel %vm252, %v240, 0
        %v332 = vsel %vm252, %v241, 0
        %v335 = vsel %vm252, %v242, 0
        %v338 = vsel %vm252, %v243, 0
        %v341 = vsel %vm252, %v244, 0
        %v344 = vsel %vm252, %v245, 0
        %v347 = vsel %vm252, %v246, 0
        %vm349 = vcmask 1043456
        %v351 = vsel %vm349, %v251, 0
        %353 = vmatprep.subr.mxu0 0.0
        %354 = vmatpush1.msra.mxu0 %v247
        %355 = vmatprep.subr.mxu0 0.0
        %356 = vmatpush1.msra.mxu0 %v248
        %357 = vmatprep.subr.mxu0 0.0
        %358 = vmatpush1.msra.mxu0 %v249
        %359 = vmatprep.subr.mxu0 0.0
        %360 = vmatpush1.msra.mxu0 %v250
        %361 = vmatprep.subr.mxu0 0.0
        %362 = vmatpush1.msra.mxu0 %v351
        %363 = vmatprep.subr.mxu0 0.0
        %364 = vmatpush1.msra.mxu0 0.0
        %365 = vmatprep.subr.mxu0 0.0
        %366 = vmatpush1.msra.mxu0 0.0
        %367 = vmatprep.subr.mxu0 0.0
        %368 = vmatpush1.msra.mxu0 0.0
        %369 = vmatprep.subr.mxu0 0.0
        %370 = vmatpush1.msra.mxu0 0.0
        %371 = vmatprep.subr.mxu0 0.0
        %372 = vmatpush1.msra.mxu0 0.0
        %373 = vmatprep.subr.mxu0 0.0
        %374 = vmatpush1.msra.mxu0 0.0
        %375 = vmatprep.subr.mxu0 0.0
        %376 = vmatpush1.msra.mxu0 0.0
        %377 = vmatprep.subr.mxu0 0.0
        %378 = vmatpush1.msra.mxu0 0.0
        %379 = vmatprep.subr.mxu0 0.0
        %380 = vmatpush1.msra.mxu0 0.0
        %381 = vmatprep.subr.mxu0 0.0
        %382 = vmatpush1.msra.mxu0 0.0
        %383 = vmatprep.subr.mxu0 0.0
        %384 = vmatpush1.msra.mxu0 0.0
        %385 = vmatprep.subr.mxu0 0.0
        %386 = vmatpush1.msra.mxu0 0.0
        %387 = vmatprep.subr.mxu0 0.0
        %388 = vmatpush1.msra.mxu0 0.0
        %389 = vmatprep.subr.mxu0 0.0
        %390 = vmatpush1.msra.mxu0 0.0
        %391 = vmatprep.subr.mxu0 0.0
        %392 = vmatpush1.msra.mxu0 0.0
        %393 = vmatprep.subr.mxu0 0.0
        %394 = vmatpush1.msra.mxu0 0.0
        %395 = vmatprep.subr.mxu0 0.0
        %396 = vmatpush1.msra.mxu0 0.0
        %397 = vmatprep.subr.mxu0 0.0
        %398 = vmatpush1.msra.mxu0 0.0
        %399 = vmatprep.subr.mxu0 0.0
        %400 = vmatpush1.msra.mxu0 0.0
        %401 = vmatprep.subr.mxu0 0.0
        %402 = vmatpush1.msra.mxu0 0.0
        %403 = vmatprep.subr.mxu0 0.0
        %404 = vmatpush1.msra.mxu0 0.0
        %405 = vmatprep.subr.mxu0 0.0
        %406 = vmatpush1.msra.mxu0 0.0
        %407 = vmatprep.subr.mxu0 0.0
        %408 = vmatpush1.msra.mxu0 0.0
        %409 = vmatprep.subr.mxu0 0.0
        %410 = vmatpush1.msra.mxu0 0.0
        %411 = vmatprep.subr.mxu0 0.0
        %412 = vmatpush1.msra.mxu0 0.0
        %413 = vmatprep.subr.mxu0 0.0
        %414 = vmatpush1.msra.mxu0 0.0
        %415 = vmatprep.subr.mxu0 0.0
        %416 = vmatpush1.msra.mxu0 0.0
        %417 = vmatprep.mubr.f32.mxu0 0.0
        %418 = vmatmul.mubr.f32.gmra.mrb[0].mxu0 %v254
        %v419 = vpop.f32.mrb[0].mxu0
        %v420 = vadd.f32 0.0, %v419
        %v421 = vpop.f32.mrb[0].mxu0
        %422 = vmatprep.mubr.f32.mxu0 0.0
        %423 = vmatmul.mubr.f32.gmra.mrb[0].mxu0 %v257
        %v424 = vpop.f32.mrb[0].mxu0
        %v425 = vadd.f32 0.0, %v424
        %v426 = vpop.f32.mrb[0].mxu0
        %427 = vmatprep.mubr.f32.mxu0 0.0
        %428 = vmatmul.mubr.f32.gmra.mrb[0].mxu0 %v260
        %v429 = vpop.f32.mrb[0].mxu0
        %v430 = vadd.f32 0.0, %v429
        %v431 = vpop.f32.mrb[0].mxu0
        %432 = vmatprep.mubr.f32.mxu0 0.0
        %433 = vmatmul.mubr.f32.gmra.mrb[0].mxu0 %v263
        %v434 = vpop.f32.mrb[0].mxu0
        %v435 = vadd.f32 0.0, %v434
        %v436 = vpop.f32.mrb[0].mxu0
        %437 = vmatprep.mubr.f32.mxu0 0.0
        %438 = vmatmul.mubr.f32.gmra.mrb[0].mxu0 %v266
        %v439 = vpop.f32.mrb[0].mxu0
        %v440 = vadd.f32 0.0, %v439
        %v441 = vpop.f32.mrb[0].mxu0
        %442 = vmatprep.mubr.f32.mxu0 0.0
        %443 = vmatmul.mubr.f32.gmra.mrb[0].mxu0 %v269
        %v444 = vpop.f32.mrb[0].mxu0
        %v445 = vadd.f32 0.0, %v444
        %v446 = vpop.f32.mrb[0].mxu0
        %447 = vmatprep.mubr.f32.mxu0 0.0
        %448 = vmatmul.mubr.f32.gmra.mrb[0].mxu0 %v272
        %v449 = vpop.f32.mrb[0].mxu0
        %v450 = vadd.f32 0.0, %v449
        %v451 = vpop.f32.mrb[0].mxu0
        %452 = vmatprep.mubr.f32.mxu0 0.0
        %453 = vmatmul.mubr.f32.gmra.mrb[0].mxu0 %v275
        %v454 = vpop.f32.mrb[0].mxu0
        %v455 = vadd.f32 0.0, %v454
        %v456 = vpop.f32.mrb[0].mxu0
        %457 = vmatprep.mubr.f32.mxu0 0.0
        %458 = vmatmul.mubr.f32.gmra.mrb[0].mxu0 %v278
        %v459 = vpop.f32.mrb[0].mxu0
        %v460 = vadd.f32 0.0, %v459
        %v461 = vpop.f32.mrb[0].mxu0
        %462 = vmatprep.mubr.f32.mxu0 0.0
        %463 = vmatmul.mubr.f32.gmra.mrb[0].mxu0 %v281
        %v464 = vpop.f32.mrb[0].mxu0
        %v465 = vadd.f32 0.0, %v464
        %v466 = vpop.f32.mrb[0].mxu0
        %467 = vmatprep.mubr.f32.mxu0 0.0
        %468 = vmatmul.mubr.f32.gmra.mrb[0].mxu0 %v284
        %v469 = vpop.f32.mrb[0].mxu0
        %v470 = vadd.f32 0.0, %v469
        %v471 = vpop.f32.mrb[0].mxu0
        %472 = vmatprep.mubr.f32.mxu0 0.0
        %473 = vmatmul.mubr.f32.gmra.mrb[0].mxu0 %v287
        %v474 = vpop.f32.mrb[0].mxu0
        %v475 = vadd.f32 0.0, %v474
        %v476 = vpop.f32.mrb[0].mxu0
        %477 = vmatprep.mubr.f32.mxu0 0.0
        %478 = vmatmul.mubr.f32.gmra.mrb[0].mxu0 %v290
        %v479 = vpop.f32.mrb[0].mxu0
        %v480 = vadd.f32 0.0, %v479
        %v481 = vpop.f32.mrb[0].mxu0
        %482 = vmatprep.mubr.f32.mxu0 0.0
        %483 = vmatmul.mubr.f32.gmra.mrb[0].mxu0 %v293
        %v484 = vpop.f32.mrb[0].mxu0
        %v485 = vadd.f32 0.0, %v484
        %v486 = vpop.f32.mrb[0].mxu0
        %487 = vmatprep.mubr.f32.mxu0 0.0
        %488 = vmatmul.mubr.f32.gmra.mrb[0].mxu0 %v296
        %v489 = vpop.f32.mrb[0].mxu0
        %v490 = vadd.f32 0.0, %v489
        %v491 = vpop.f32.mrb[0].mxu0
        %492 = vmatprep.mubr.f32.mxu0 0.0
        %493 = vmatmul.mubr.f32.gmra.mrb[0].mxu0 %v299
        %v494 = vpop.f32.mrb[0].mxu0
        %v495 = vadd.f32 0.0, %v494
        %v496 = vpop.f32.mrb[0].mxu0
        %497 = vmatprep.mubr.f32.mxu0 0.0
        %498 = vmatmul.mubr.f32.gmra.mrb[0].mxu0 %v302
        %v499 = vpop.f32.mrb[0].mxu0
        %v500 = vadd.f32 0.0, %v499
        %v501 = vpop.f32.mrb[0].mxu0
        %502 = vmatprep.mubr.f32.mxu0 0.0
        %503 = vmatmul.mubr.f32.gmra.mrb[0].mxu0 %v305
        %v504 = vpop.f32.mrb[0].mxu0
        %v505 = vadd.f32 0.0, %v504
        %v506 = vpop.f32.mrb[0].mxu0
        %507 = vmatprep.mubr.f32.mxu0 0.0
        %508 = vmatmul.mubr.f32.gmra.mrb[0].mxu0 %v308
        %v509 = vpop.f32.mrb[0].mxu0
        %v510 = vadd.f32 0.0, %v509
        %v511 = vpop.f32.mrb[0].mxu0
        %512 = vmatprep.mubr.f32.mxu0 0.0
        %513 = vmatmul.mubr.f32.gmra.mrb[0].mxu0 %v311
        %v514 = vpop.f32.mrb[0].mxu0
        %v515 = vadd.f32 0.0, %v514
        %v516 = vpop.f32.mrb[0].mxu0
        %517 = vmatprep.mubr.f32.mxu0 0.0
        %518 = vmatmul.mubr.f32.gmra.mrb[0].mxu0 %v314
        %v519 = vpop.f32.mrb[0].mxu0
        %v520 = vadd.f32 0.0, %v519
        %v521 = vpop.f32.mrb[0].mxu0
        %522 = vmatprep.mubr.f32.mxu0 0.0
        %523 = vmatmul.mubr.f32.gmra.mrb[0].mxu0 %v317
        %v524 = vpop.f32.mrb[0].mxu0
        %v525 = vadd.f32 0.0, %v524
        %v526 = vpop.f32.mrb[0].mxu0
        %527 = vmatprep.mubr.f32.mxu0 0.0
        %528 = vmatmul.mubr.f32.gmra.mrb[0].mxu0 %v320
        %v529 = vpop.f32.mrb[0].mxu0
        %v530 = vadd.f32 0.0, %v529
        %v531 = vpop.f32.mrb[0].mxu0
        %532 = vmatprep.mubr.f32.mxu0 0.0
        %533 = vmatmul.mubr.f32.gmra.mrb[0].mxu0 %v323
        %v534 = vpop.f32.mrb[0].mxu0
        %v535 = vadd.f32 0.0, %v534
        %v536 = vpop.f32.mrb[0].mxu0
        %537 = vmatprep.mubr.f32.mxu0 0.0
        %538 = vmatmul.mubr.f32.gmra.mrb[0].mxu0 %v326
        %v539 = vpop.f32.mrb[0].mxu0
        %v540 = vadd.f32 0.0, %v539
        %v541 = vpop.f32.mrb[0].mxu0
        %542 = vmatprep.mubr.f32.mxu0 0.0
        %543 = vmatmul.mubr.f32.gmra.mrb[0].mxu0 %v329
        %v544 = vpop.f32.mrb[0].mxu0
        %v545 = vadd.f32 0.0, %v544
        %v546 = vpop.f32.mrb[0].mxu0
        %547 = vmatprep.mubr.f32.mxu0 0.0
        %548 = vmatmul.mubr.f32.gmra.mrb[0].mxu0 %v332
        %v549 = vpop.f32.mrb[0].mxu0
        %v550 = vadd.f32 0.0, %v549
        %v551 = vpop.f32.mrb[0].mxu0
        %552 = vmatprep.mubr.f32.mxu0 0.0
        %553 = vmatmul.mubr.f32.gmra.mrb[0].mxu0 %v335
        %v554 = vpop.f32.mrb[0].mxu0
        %v555 = vadd.f32 0.0, %v554
        %v556 = vpop.f32.mrb[0].mxu0
        %557 = vmatprep.mubr.f32.mxu0 0.0
        %558 = vmatmul.mubr.f32.gmra.mrb[0].mxu0 %v338
        %v559 = vpop.f32.mrb[0].mxu0
        %v560 = vadd.f32 0.0, %v559
        %v561 = vpop.f32.mrb[0].mxu0
        %562 = vmatprep.mubr.f32.mxu0 0.0
        %563 = vmatmul.mubr.f32.gmra.mrb[0].mxu0 %v341
        %v564 = vpop.f32.mrb[0].mxu0
        %v565 = vadd.f32 0.0, %v564
        %v566 = vpop.f32.mrb[0].mxu0
        %567 = vmatprep.mubr.f32.mxu0 0.0
        %568 = vmatmul.mubr.f32.gmra.mrb[0].mxu0 %v344
        %v569 = vpop.f32.mrb[0].mxu0
        %v570 = vadd.f32 0.0, %v569
        %v571 = vpop.f32.mrb[0].mxu0
        %572 = vmatprep.mubr.f32.mxu0 0.0
        %573 = vmatmul.mubr.f32.gmra.mrb[0].mxu0 %v347
        %v574 = vpop.f32.mrb[0].mxu0
        %v575 = vadd.f32 0.0, %v574
        %v576 = vpop.f32.mrb[0].mxu0
        %577 = vdwg.mxu0
        %578 = vst [vmem:[%s195] sm:$0xff] %v420
        %579 = vst [vmem:[%s195 + $0x8] sm:$0xff] %v425
        %580 = vst [vmem:[%s195 + $0x10] sm:$0xff] %v430
        %581 = vst [vmem:[%s195 + $0x18] sm:$0xff] %v435
        %582 = vst [vmem:[%s195 + $0x20] sm:$0xff] %v440
        %583 = vst [vmem:[%s195 + $0x28] sm:$0xff] %v445
        %584 = vst [vmem:[%s195 + $0x30] sm:$0xff] %v450
        %585 = vst [vmem:[%s195 + $0x38] sm:$0xff] %v455
        %586 = vst [vmem:[%s195 + $0x40] sm:$0xff] %v460
        %587 = vst [vmem:[%s195 + $0x48] sm:$0xff] %v465
        %588 = vst [vmem:[%s195 + $0x50] sm:$0xff] %v470
        %589 = vst [vmem:[%s195 + $0x58] sm:$0xff] %v475
        %590 = vst [vmem:[%s195 + $0x60] sm:$0xff] %v480
        %591 = vst [vmem:[%s195 + $0x68] sm:$0xff] %v485
        %592 = vst [vmem:[%s195 + $0x70] sm:$0xff] %v490
        %593 = vst [vmem:[%s195 + $0x78] sm:$0xff] %v495
        %594 = vst [vmem:[%s195 + $0x80] sm:$0xff] %v500
        %595 = vst [vmem:[%s195 + $0x88] sm:$0xff] %v505
        %596 = vst [vmem:[%s195 + $0x90] sm:$0xff] %v510
        %597 = vst [vmem:[%s195 + $0x98] sm:$0xff] %v515
        %598 = vst [vmem:[%s195 + $0xa0] sm:$0xff] %v520
        %599 = vst [vmem:[%s195 + $0xa8] sm:$0xff] %v525
        %600 = vst [vmem:[%s195 + $0xb0] sm:$0xff] %v530
        %601 = vst [vmem:[%s195 + $0xb8] sm:$0xff] %v535
        %602 = vst [vmem:[%s195 + $0xc0] sm:$0xff] %v540
        %603 = vst [vmem:[%s195 + $0xc8] sm:$0xff] %v545
        %604 = vst [vmem:[%s195 + $0xd0] sm:$0xff] %v550
        %605 = vst [vmem:[%s195 + $0xd8] sm:$0xff] %v555
        %606 = vst [vmem:[%s195 + $0xe0] sm:$0xff] %v560
        %607 = vst [vmem:[%s195 + $0xe8] sm:$0xff] %v565
        %608 = vst [vmem:[%s195 + $0xf0] sm:$0xff] %v570
        %609 = vst [vmem:[%s195 + $0xf8] sm:$0xff] %v575
        %v610 = vadd.f32 %v420, %v425
        %v611 = vadd.f32 %v610, %v430
        %v612 = vadd.f32 %v611, %v435
        %v613 = vadd.f32 %v612, %v440
        %v614 = vadd.f32 %v613, %v445
        %v615 = vadd.f32 %v614, %v450
        %v616 = vadd.f32 %v615, %v455
        %v617 = vadd.f32 %v616, %v460
        %v618 = vadd.f32 %v617, %v465
        %v619 = vadd.f32 %v618, %v470
        %v620 = vadd.f32 %v619, %v475
        %v621 = vadd.f32 %v620, %v480
        %v622 = vadd.f32 %v621, %v485
        %v623 = vadd.f32 %v622, %v490
        %v624 = vadd.f32 %v623, %v495
        %v625 = vadd.f32 %v624, %v500
        %v626 = vadd.f32 %v625, %v505
        %v627 = vadd.f32 %v626, %v510
        %v628 = vadd.f32 %v627, %v515
        %v629 = vadd.f32 %v628, %v520
        %v630 = vadd.f32 %v629, %v525
        %v631 = vadd.f32 %v630, %v530
        %v632 = vadd.f32 %v631, %v535
        %v633 = vadd.f32 %v632, %v540
        %v634 = vadd.f32 %v633, %v545
        %v635 = vadd.f32 %v634, %v550
        %v636 = vadd.f32 %v635, %v555
        %v637 = vadd.f32 %v636, %v560
        %v638 = vadd.f32 %v637, %v565
        %v639 = vadd.f32 %v638, %v570
        %v640 = vadd.f32 %v639, %v575
        %v641 = vrot.slane %v640, 4
        %v642 = vadd.f32 %v640, %v641
        %v643 = vrot.slane %v642, 2
        %v644 = vadd.f32 %v642, %v643
        %v645 = vrot.slane %v644, 1
        %v646 = vadd.f32 %v644, %v645
        %v647 = vmul.f32 %v420, %v420
        %v648 = vmul.f32 %v425, %v425
        %v649 = vmul.f32 %v430, %v430
        %v650 = vmul.f32 %v435, %v435
        %v651 = vmul.f32 %v440, %v440
        %v652 = vmul.f32 %v445, %v445
        %v653 = vmul.f32 %v450, %v450
        %v654 = vmul.f32 %v455, %v455
        %v655 = vmul.f32 %v460, %v460
        %v656 = vmul.f32 %v465, %v465
        %v657 = vmul.f32 %v470, %v470
        %v658 = vmul.f32 %v475, %v475
        %v659 = vmul.f32 %v480, %v480
        %v660 = vmul.f32 %v485, %v485
        %v661 = vmul.f32 %v490, %v490
        %v662 = vmul.f32 %v495, %v495
        %v663 = vmul.f32 %v500, %v500
        %v664 = vmul.f32 %v505, %v505
        %v665 = vmul.f32 %v510, %v510
        %v666 = vmul.f32 %v515, %v515
        %v667 = vmul.f32 %v520, %v520
        %v668 = vmul.f32 %v525, %v525
        %v669 = vmul.f32 %v530, %v530
        %v670 = vmul.f32 %v535, %v535
        %v671 = vmul.f32 %v540, %v540
        %v672 = vmul.f32 %v545, %v545
        %v673 = vmul.f32 %v550, %v550
        %v674 = vmul.f32 %v555, %v555
        %v675 = vmul.f32 %v560, %v560
        %v676 = vmul.f32 %v565, %v565
        %v677 = vmul.f32 %v570, %v570
        %v678 = vmul.f32 %v575, %v575
        %v679 = vadd.f32 %v647, %v648
        %v680 = vadd.f32 %v679, %v649
        %v681 = vadd.f32 %v680, %v650
        %v682 = vadd.f32 %v681, %v651
        %v683 = vadd.f32 %v682, %v652
        %v684 = vadd.f32 %v683, %v653
        %v685 = vadd.f32 %v684, %v654
        %v686 = vadd.f32 %v685, %v655
        %v687 = vadd.f32 %v686, %v656
        %v688 = vadd.f32 %v687, %v657
        %v689 = vadd.f32 %v688, %v658
        %v690 = vadd.f32 %v689, %v659
        %v691 = vadd.f32 %v690, %v660
        %v692 = vadd.f32 %v691, %v661
        %v693 = vadd.f32 %v692, %v662
        %v694 = vadd.f32 %v693, %v663
        %v695 = vadd.f32 %v694, %v664
        %v696 = vadd.f32 %v695, %v665
        %v697 = vadd.f32 %v696, %v666
        %v698 = vadd.f32 %v697, %v667
        %v699 = vadd.f32 %v698, %v668
        %v700 = vadd.f32 %v699, %v669
        %v701 = vadd.f32 %v700, %v670
        %v702 = vadd.f32 %v701, %v671
        %v703 = vadd.f32 %v702, %v672
        %v704 = vadd.f32 %v703, %v673
        %v705 = vadd.f32 %v704, %v674
        %v706 = vadd.f32 %v705, %v675
        %v707 = vadd.f32 %v706, %v676
        %v708 = vadd.f32 %v707, %v677
        %v709 = vadd.f32 %v708, %v678
        %v710 = vrot.slane %v709, 4
        %v711 = vadd.f32 %v709, %v710
        %v712 = vrot.slane %v711, 2
        %v713 = vadd.f32 %v711, %v712
        %v714 = vrot.slane %v713, 1
        %v715 = vadd.f32 %v713, %v714
        %716 = vst [vmem:[%s201] sm:$0x1] %v646
        %717 = vst [vmem:[%s207] sm:$0x1] %v715
        %s718 = sand.u32 %s77, 1
        %s719 = scalar_lea.sflag [#allocation3], %s718
        %s720 = sand.u32 %s77, 1
        %s721 = smul.addr %s720, 256
        %s722 = scalar_lea.vmem [#allocation2], %s721
        %s723 = sand.u32 %s22, 1
        %s724 = scalar_lea.sflag [#allocation5], %s723
        %s725 = sand.u32 %s103, 1
        %s726 = scalar_lea.vmem [#allocation4], %s725
        %s727 = sand.u32 %s22, 1
        %s728 = scalar_lea.sflag [#allocation5], %s727
        %s729 = sand.u32 %s129, 1
        %s730 = scalar_lea.vmem [#allocation6], %s729
        // Predicated region
        $region29: #{tpu_custom_call.1} parent=27 // pred_check
          %p731 = pneg %p87
        $region30: #{tpu_custom_call.1} parent=27 // pred_check_branch
          %733 = sbr.rel (%p731) target = $region32
        $region31: #{tpu_custom_call.1} parent=27 // pred_region
          %s734 = smul.u32 32, %s22
          %s736 = ssub.s32 4096, 4096
          %737 = vsyncadd %s719, %s736
          %s738 = smul.addr %s734, 128
          %s739 = scalar_lea.hbm %s2, %s738
          %s740 = sshll.u32 %s722, 4
          %s741 = int_to_ptr.vmem [resolvable:$true] %s740
          %746 = dma.vmem_to_hbm [thread:$0]  %s741, 4096, %s739, %s719, 128, 128, 8
        $region32: #{tpu_custom_call.1} parent=27 // pred_fallthru
          _
        // Predicated region
        $region33: #{tpu_custom_call.1} parent=27 // pred_check
          %p747 = pneg %p113
        $region34: #{tpu_custom_call.1} parent=27 // pred_check_branch
          %749 = sbr.rel (%p747) target = $region36
        $region35: #{tpu_custom_call.1} parent=27 // pred_region
          %s751 = ssub.s32 16, 16
          %752 = vsyncadd %s724, %s751
          %s753 = smul.addr %s22, 16
          %s754 = scalar_lea.hbm %s3, %s753
          %s756 = sshll.u32 %s726, 4
          %s757 = int_to_ptr.vmem [resolvable:$true] %s756
          %759 = dma.vmem_to_hbm [thread:$0]  %s757, 16, %s754, %s724
        $region36: #{tpu_custom_call.1} parent=27 // pred_fallthru
          _
        // Predicated region
        $region37: #{tpu_custom_call.1} parent=27 // pred_check
          %p760 = pneg %p139
        $region38: #{tpu_custom_call.1} parent=27 // pred_check_branch
          %762 = sbr.rel (%p760) target = $region40
        $region39: #{tpu_custom_call.1} parent=27 // pred_region
          %s764 = ssub.s32 16, 16
          %765 = vsyncadd %s728, %s764
          %s766 = smul.addr %s22, 16
          %s767 = scalar_lea.hbm %s4, %s766
          %s769 = sshll.u32 %s730, 4
          %s770 = int_to_ptr.vmem [resolvable:$true] %s769
          %772 = dma.vmem_to_hbm [thread:$0]  %s770, 16, %s767, %s728
        $region40: #{tpu_custom_call.1} parent=27 // pred_fallthru
          _
      $region28: #{tpu_custom_call.1} parent=5 // pred_fallthru
        _
      %p773 = scmp.le.s32.totalorder 2, %s17
      // Predicated region
      $region41: #{tpu_custom_call.1} parent=5 // pred_check
        %p774 = pneg %p773
      $region42: #{tpu_custom_call.1} parent=5 // pred_check_branch
        %776 = sbr.rel (%p774) target = $region44
      $region43: #{tpu_custom_call.1} parent=5 // pred_region
        %s777 = ssub.s32 %s17, 2
        // Predicated region
        $region45: #{tpu_custom_call.1} parent=43 // pred_check
          %p778 = pneg %p93
        $region46: #{tpu_custom_call.1} parent=43 // pred_check_branch
          %780 = sbr.rel (%p778) target = $region48
        $region47: #{tpu_custom_call.1} parent=43 // pred_region
          %s781 = sand.u32 %s78, 1
          %s782 = scalar_lea.sflag [#allocation3], %s781
          %s783 = sand.u32 %s78, 1
          %s784 = smul.addr %s783, 256
          %s785 = scalar_lea.vmem [#allocation2], %s784
          %786 = dma.done %s782, 4096
        $region48: #{tpu_custom_call.1} parent=43 // pred_fallthru
          _
        // Predicated region
        $region49: #{tpu_custom_call.1} parent=43 // pred_check
          %p787 = pneg %p119
        $region50: #{tpu_custom_call.1} parent=43 // pred_check_branch
          %789 = sbr.rel (%p787) target = $region52
        $region51: #{tpu_custom_call.1} parent=43 // pred_region
          %s790 = sand.u32 %s23, 1
          %s791 = scalar_lea.sflag [#allocation5], %s790
          %s792 = sand.u32 %s104, 1
          %s793 = scalar_lea.vmem [#allocation4], %s792
          %794 = dma.done %s791, 16
        $region52: #{tpu_custom_call.1} parent=43 // pred_fallthru
          _
        // Predicated region
        $region53: #{tpu_custom_call.1} parent=43 // pred_check
          %p795 = pneg %p145
        $region54: #{tpu_custom_call.1} parent=43 // pred_check_branch
          %797 = sbr.rel (%p795) target = $region56
        $region55: #{tpu_custom_call.1} parent=43 // pred_region
          %s798 = sand.u32 %s23, 1
          %s799 = scalar_lea.sflag [#allocation5], %s798
          %s800 = sand.u32 %s130, 1
          %s801 = scalar_lea.vmem [#allocation6], %s800
          %802 = dma.done %s799, 16
        $region56: #{tpu_custom_call.1} parent=43 // pred_fallthru
          _
      $region44: #{tpu_custom_call.1} parent=5 // pred_fallthru
        _
    $region6: #{tpu_custom_call.1} parent=1 // loop_footer
      %s21 = sadd.s32 1, %s17
    $region7: #{tpu_custom_call.1} parent=1 // loop_footer_branch
      %16 = sbr.rel target = $region3
    $region8: #{tpu_custom_call.1} parent=1 // loop_exit
      _
    %803 = vsyncpa [#allocation3], 1
    %s804 = scalar_lea.sflag [#allocation3], 1
    %805 = vsyncpa %s804, 1
    %806 = vsyncpa [#allocation5], 1
    %s807 = scalar_lea.sflag [#allocation5], 1
    %808 = vsyncpa %s807, 1

</llo_original>
